<compile_context>
chip_gen: v5e
topology: v5e:2x2
jax: 0.10.0
libtpu: 0.0.40
codegen_flags: <defaults>
</compile_context>

<pallas_src>
import jax
import jax.numpy as jnp
from jax.experimental import pallas as pl
from jax.experimental.pallas import tpu as pltpu


def normalize_kernel(sb_ref, x_ref, o_ref):
    # sb_ref: (row_tile, 2) f32 block; column 0 = 1/sd, column 1 = -mean/sd per row.
    # x_ref / o_ref: (row_tile, lane_tile) blocks of the (B*C, H*W) view.
    scale = sb_ref[:, 0:1]
    bias = sb_ref[:, 1:2]
    x = x_ref[...].astype(jnp.float32)  # f32 math regardless of input dtype
    o_ref[...] = (x * scale + bias).astype(o_ref.dtype)


def _round_up(x, m):
    return ((x + m - 1) // m) * m


def _default_target_block_bytes():
    # 2 MiB blocks keep in+out double buffers well under v5e's 16 MiB scoped-VMEM
    # default; v6e/v7x (32 MiB scoped VMEM, faster HBM) amortize the ~0.35 us
    # per-step cost slightly better with 4 MiB blocks.
    try:
        kind = jax.devices()[0].device_kind.lower()
    except Exception:
        return 2 << 20
    if "v6" in kind or "v7" in kind:
        return 4 << 20
    return 2 << 20


def _choose_tiles(n_rows, hw, itemsize, target_bytes, min_steps=8,
                  min_block_bytes=512 << 10):
    """Pick (row_tile, lane_tile) for the (n_rows, hw) elementwise view.

    Priorities: (1) block <= target_bytes, (2) >= min_steps total grid steps,
    (3) block >= min_block_bytes (never shrink below the floor just to add steps),
    then maximize block size, preferring even step counts (v7x: 2 TCs) and exact
    divisors of n_rows (no padded tail block).
    """
    # Sub-32-bit dtypes pack 2/4 rows per sublane; match that packing.
    row_gran = {4: 8, 2: 16, 1: 32}.get(itemsize, 8)

    # Lane tile: full H*W whenever one row-granule block fits the target, otherwise
    # a multiple of 128 (lane-dense stores) that does.
    if hw <= 128 or row_gran * hw * itemsize <= target_bytes:
        lane_tile = hw
    else:
        cap = (target_bytes // (row_gran * itemsize)) // 128 * 128
        lane_tile = max(128, min(cap, (hw // 128) * 128))
    n_lane_blocks = pl.cdiv(hw, lane_tile)

    if n_rows <= row_gran:
        return n_rows, lane_tile  # full-extent row block is always legal

    block_row_bytes = lane_tile * itemsize
    bytes_cap_rows = (target_bytes // block_row_bytes) // row_gran * row_gran
    max_mult = min((n_rows // row_gran) * row_gran, max(row_gran, bytes_cap_rows))
    candidates = list(range(row_gran, max_mult + 1, row_gran))
    if n_rows * block_row_bytes <= target_bytes and n_rows not in candidates:
        candidates.append(n_rows)  # full-extent row block (legal for any n_rows)

    def steps(rt):
        return pl.cdiv(n_rows, rt) * n_lane_blocks

    def nbytes(rt):
        return rt * block_row_bytes

    def pick_best(pool):
        even = [rt for rt in pool if steps(rt) % 2 == 0] or pool
        exact = [rt for rt in even if n_rows % rt == 0] or even
        return max(exact)

    good = [rt for rt in candidates if steps(rt) >= min_steps]
    if good:
        pool = [rt for rt in good if nbytes(rt) >= min_block_bytes] or good
        return pick_best(pool), lane_tile
    # Even the smallest tile can't reach min_steps: take as many steps as the
    # block-size floor allows, or the largest block if everything is tiny.
    pool = [rt for rt in candidates if nbytes(rt) >= min_block_bytes]
    return (min(pool) if pool else max(candidates)), lane_tile


def normalize_layer(x, means, sds, *, target_block_bytes=None, min_steps=8,
                    min_pallas_bytes=1 << 20):
    """(x - means[c]) / sds[c] over an NCHW batch, matching NormalizeLayer.forward."""
    B, C, H, W = x.shape
    HW = H * W
    n_rows = B * C
    itemsize = jnp.dtype(x.dtype).itemsize

    # Per-channel constants kept in f32: y = x * (1/sd) + (-mean/sd).
    scale = 1.0 / sds.astype(jnp.float32)        # (C,)
    bias = -means.astype(jnp.float32) * scale    # (C,)

    # Tiny-input fast path: kernel launch + DMA latency dominates below ~1 MiB.
    if x.size * itemsize < min_pallas_bytes:
        y = (x.astype(jnp.float32) * scale.reshape(1, C, 1, 1)
             + bias.reshape(1, C, 1, 1))
        return y.astype(x.dtype)

    if target_block_bytes is None:
        target_block_bytes = _default_target_block_bytes()

    # One (scale, bias) row per (b, c) image plane -> fused (B*C, 2) side input.
    sb_rows = jnp.tile(jnp.stack([scale, bias], axis=-1), (B, 1))   # (B*C, 2)
    x2 = x.reshape(n_rows, HW)

    row_tile, lane_tile = _choose_tiles(n_rows, HW, itemsize,
                                        target_block_bytes, min_steps)
    grid = (pl.cdiv(n_rows, row_tile), pl.cdiv(HW, lane_tile))

    out2 = pl.pallas_call(
        normalize_kernel,
        out_shape=jax.ShapeDtypeStruct((n_rows, HW), x.dtype),
        grid=grid,
        in_specs=[
            pl.BlockSpec((row_tile, 2), lambda i, j: (i, 0)),          # scale|bias
            pl.BlockSpec((row_tile, lane_tile), lambda i, j: (i, j)),  # x rows
        ],
        out_specs=pl.BlockSpec((row_tile, lane_tile), lambda i, j: (i, j)),
        compiler_params=pltpu.CompilerParams(
            dimension_semantics=("parallel", "parallel")),
    )(sb_rows, x2)

    return out2.reshape(B, C, H, W)


if __name__ == "__main__":
    B, C, H, W = 2, 4, 16, 16

    # Deterministic "dataset" statistics (length-C vectors, as in the module __init__).
    means = jnp.array([0.4914, 0.4822, 0.4465, 0.5000], dtype=jnp.float32)
    sds = jnp.array([0.2023, 0.1994, 0.2010, 0.2500], dtype=jnp.float32)

    key = jax.random.PRNGKey(0)
    x = jax.random.uniform(key, (B, C, H, W), dtype=jnp.float32)

    # min_pallas_bytes=0 forces the Pallas kernel even at this demo size
    # (the default routes sub-1 MiB inputs to the plain-XLA fast path).
    out = normalize_layer(x, means, sds, min_pallas_bytes=0)
    jax.block_until_ready(out)

    # Reference: plain-JAX broadcasting semantics (exact divide). The kernel uses a
    # scale/bias FMA in f32, so allow ~1 ulp slack.
    ref = (x - means.reshape(1, C, 1, 1)) / sds.reshape(1, C, 1, 1)
    assert out.shape == (B, C, H, W)
    assert jnp.allclose(out, ref, atol=1e-5, rtol=1e-5)

    print("KERNEL_OK")
</pallas_src>

<mosaic_0001>
module attributes {stable_mosaic.version = 11 : i64} {
  func.func @normalize_kernel(%arg0: i32, %arg1: i32, %arg2: memref<8x2xf32, #tpu.memory_space<vmem>>, %arg3: memref<8x256xf32, #tpu.memory_space<vmem>>, %arg4: memref<8x256xf32, #tpu.memory_space<vmem>>) attributes {dimension_semantics = [#tpu.dimension_semantics<parallel>, #tpu.dimension_semantics<parallel>], iteration_bounds = array<i64: 1, 1>, scalar_prefetch = 0 : i64, scratch_operands = 0 : i64, tpu.core_type = #tpu.core_type<tc>, window_params = [{transform_indices = @transform_0, window_bounds = array<i64: 8, 2>}, {transform_indices = @transform_1, window_bounds = array<i64: 8, 256>}, {transform_indices = @transform_2, window_bounds = array<i64: 8, 256>}]} {
    %c0 = arith.constant 0 : index
    %c0_0 = arith.constant 0 : index
    %0 = vector.load %arg2[%c0, %c0_0] : memref<8x2xf32, #tpu.memory_space<vmem>>, vector<8x1xf32>
    %c0_1 = arith.constant 0 : index
    %c1 = arith.constant 1 : index
    %1 = vector.load %arg2[%c0_1, %c1] : memref<8x2xf32, #tpu.memory_space<vmem>>, vector<8x1xf32>
    %c0_2 = arith.constant 0 : index
    %c0_3 = arith.constant 0 : index
    %2 = vector.load %arg3[%c0_2, %c0_3] : memref<8x256xf32, #tpu.memory_space<vmem>>, vector<8x256xf32>
    %3 = vector.broadcast %0 : vector<8x1xf32> to vector<8x256xf32>
    %4 = arith.mulf %2, %3 : vector<8x256xf32>
    %5 = vector.broadcast %1 : vector<8x1xf32> to vector<8x256xf32>
    %6 = arith.addf %4, %5 : vector<8x256xf32>
    %c0_4 = arith.constant 0 : index
    %c0_5 = arith.constant 0 : index
    %7 = vector.load %arg4[%c0_4, %c0_5] : memref<8x256xf32, #tpu.memory_space<vmem>>, vector<8x256xf32>
    tpu.vector_store %arg4[%c0_4, %c0_5], %6 {strides = array<i32>} : memref<8x256xf32, #tpu.memory_space<vmem>>, vector<8x256xf32>,
    return
  }
  func.func @transform_0(%arg0: i32, %arg1: i32) -> (i32, i32) {
    %c0_i32 = arith.constant 0 : i32
    %c0_i32_0 = arith.constant 0 : i32
    return %arg0, %c0_i32 : i32, i32
  }
  func.func @transform_1(%arg0: i32, %arg1: i32) -> (i32, i32) {
    %c0_i32 = arith.constant 0 : i32
    return %arg0, %arg1 : i32, i32
  }
  func.func @transform_2(%arg0: i32, %arg1: i32) -> (i32, i32) {
    %c0_i32 = arith.constant 0 : i32
    return %arg0, %arg1 : i32, i32
  }
}

</mosaic_0001>

<llo_original>
// kernel: tpu_custom_call.1
$region0: #{tpu_custom_call.1}
  #allocation0 [shape = 'u32[]', space=smem, size = 0x4, offset = 0x4, fixed_abs, tag = 'smem constant byte address 0x4 - core index']
  #allocation1 [shape = 'u32[72,128]{1,0:T(1,128)}', space=vmem, size = 0x9000, scoped, tag = 'internal scratch']
  %s0 = inlined_call_operand.vmem [shape: f32[8,2], index: 0, kind: input, shape index: {}]
  %s1 = inlined_call_operand.hbm [shape: f32[8,256], index: 1, kind: input, shape index: {}]
  %s2 = inlined_call_operand.hbm [shape: f32[8,256], index: 2, kind: output, shape index: {}]
  %s3 = sld [smem:[#allocation0]]
  $region22: #{tpu_custom_call.1} parent=0
    _
  %s5 = ssub.s32 1, %s3
  %s6 = scalar_select 0, %s5, %s3
  $region1: #{tpu_custom_call.1} parent=0
    #allocation2 [shape = 'u8[8192]{0}', space=vmem, size = 0x2000, scoped, tag = 'input window, operand 1, single buffered']
    #allocation3 [shape = 's32[1]{0}', space=sflag, size = 0x4, scoped, tag = 'scoped memory for tpu_custom_call.1']
    #allocation4 [shape = 's32[1]{0}', space=sflag, size = 0x4, scoped, tag = 'scoped memory for tpu_custom_call.1']
    #allocation5 [shape = 'u8[8192]{0}', space=vmem, size = 0x2000, scoped, tag = 'output window, operand 0, single buffered']
    %7 = vsyncpa [#allocation3], 0
    %8 = vsyncpa [#allocation4], 0
    // Predicated region
    $region2: #{tpu_custom_call.1} parent=1 // pred_check
      _
    $region3: #{tpu_custom_call.1} parent=1 // pred_check_branch
      %10 = sbr.rel (0) target = $region5
    $region4: #{tpu_custom_call.1} parent=1 // pred_region
      _
    $region5: #{tpu_custom_call.1} parent=1 // pred_fallthru
      _
    // Predicated region
    $region6: #{tpu_custom_call.1} parent=1 // pred_check
      _
    $region7: #{tpu_custom_call.1} parent=1 // pred_check_branch
      %12 = sbr.rel (0) target = $region9
    $region8: #{tpu_custom_call.1} parent=1 // pred_region
      %14 = vsyncadd [#allocation3], 0
      %s16 = sshll.u32 %s1, 4
      %s17 = int_to_ptr.hbm [resolvable:$true] %s16
      %s18 = sshll.u32 [#allocation2], 4
      %s19 = int_to_ptr.vmem [resolvable:$true] %s18
      %21 = dma.hbm_to_vmem [thread:$0]  %s17, 256, %s19, [#allocation3]
    $region9: #{tpu_custom_call.1} parent=1 // pred_fallthru
      _
    // Predicated region
    $region10: #{tpu_custom_call.1} parent=1 // pred_check
      _
    $region11: #{tpu_custom_call.1} parent=1 // pred_check_branch
      %23 = sbr.rel (0) target = $region13
    $region12: #{tpu_custom_call.1} parent=1 // pred_region
      %25 = dma.done [#allocation3], 256
    $region13: #{tpu_custom_call.1} parent=1 // pred_fallthru
      _
    %v26 = vld [vmem:[%s0] sm:$0xff]
    %v27 = vld [vmem:[#allocation2] sm:$0xff]
    %v28 = vld [vmem:[#allocation2 + $0x8] sm:$0xff]
    %30 = vset.pattern.permute.xlu0 0
    %31 = vperm.xlu0 %30, %v26
    %v32 = vpop.permute.xlu0 %31
    %v34 = vmul.f32 %v27, %v32
    %v35 = vmul.f32 %v28, %v32
    %36 = vset.pattern.permute.xlu0 1
    %37 = vperm.xlu0 %36, %v26
    %v38 = vpop.permute.xlu0 %37
    %v40 = vadd.f32 %v34, %v38
    %v41 = vadd.f32 %v35, %v38
    %42 = vst [vmem:[#allocation5] sm:$0xff] %v40
    %43 = vst [vmem:[#allocation5 + $0x8] sm:$0xff] %v41
    // Predicated region
    $region14: #{tpu_custom_call.1} parent=1 // pred_check
      _
    $region15: #{tpu_custom_call.1} parent=1 // pred_check_branch
      %45 = sbr.rel (0) target = $region17
    $region16: #{tpu_custom_call.1} parent=1 // pred_region
      %47 = vsyncadd [#allocation4], 0
      %s49 = sshll.u32 [#allocation5], 4
      %s50 = int_to_ptr.vmem [resolvable:$true] %s49
      %s51 = sshll.u32 %s2, 4
      %s52 = int_to_ptr.hbm [resolvable:$true] %s51
      %54 = dma.vmem_to_hbm [thread:$0]  %s50, 256, %s52, [#allocation4]
    $region17: #{tpu_custom_call.1} parent=1 // pred_fallthru
      _
    // Predicated region
    $region18: #{tpu_custom_call.1} parent=1 // pred_check
      _
    $region19: #{tpu_custom_call.1} parent=1 // pred_check_branch
      %56 = sbr.rel (0) target = $region21
    $region20: #{tpu_custom_call.1} parent=1 // pred_region
      %58 = dma.done [#allocation4], 256
    $region21: #{tpu_custom_call.1} parent=1 // pred_fallthru
      _
    %59 = vsyncpa [#allocation3], 1
    %60 = vsyncpa [#allocation4], 1

</llo_original>
